<compile_context>
chip_gen: v7x
topology: tpu7x:2x2x1
jax: 0.10.0
libtpu: 0.0.40
codegen_flags: <defaults>
</compile_context>

<pallas_src>
import jax
import jax.numpy as jnp
from jax.experimental import pallas as pl
from jax.experimental.pallas import tpu as pltpu

LANE = 128      # lane width (last dim)
ROW = 16        # bf16 packs 2 rows / sublane -> batch tiles in multiples of 16


def _round_up(x, m):
    return (x + m - 1) // m * m


def _cdiv(a, b):
    return (a + b - 1) // b


def _tpu_vmem_bytes():
    """Per-TensorCore VMEM capacity; conservative fallback if query fails."""
    try:
        info = pltpu.get_tpu_info()
        cap = getattr(info, "vmem_capacity_bytes", None)
        if cap:
            return int(cap)
    except Exception:
        pass
    return 64 << 20          # v7x per-TC VMEM (smallest current generation)


# --------------------------------------------------------------------------
# Kernel: grid = (batch_tiles, k_tiles) over the hidden dim of fc1/fc2.
# --------------------------------------------------------------------------
def _mlp_kernel(x_ref, w1_ref, b1_ref, w2_ref, b2_ref, w3_ref, b3_ref,
                o_ref, acc_ref):
    k = pl.program_id(1)

    @pl.when(k == 0)
    def _init():
        acc_ref[...] = jnp.zeros_like(acc_ref)

    # fc1 (this hidden K-chunk) + bias + ReLU.  x cast to bf16 in-kernel:
    # VPU slots are idle under the MXU, so the cast is effectively free.
    xv = x_ref[...].astype(w1_ref.dtype)
    h1 = jnp.dot(xv, w1_ref[...], preferred_element_type=jnp.float32)
    h1 = jnp.maximum(h1 + b1_ref[...], 0.0)
    # dropout == identity at inference.

    # fc2 partial product accumulated over hidden K-chunks (f32 accumulator).
    acc_ref[...] += jnp.dot(h1.astype(w2_ref.dtype), w2_ref[...],
                            preferred_element_type=jnp.float32)

    @pl.when(k == pl.num_programs(1) - 1)
    def _epilogue():
        h2 = jnp.maximum(acc_ref[...] + b2_ref[...], 0.0)
        out = jnp.dot(h2.astype(w3_ref.dtype), w3_ref[...],
                      preferred_element_type=jnp.float32)
        o_ref[...] = (out + b3_ref[...]).astype(o_ref.dtype)


# --------------------------------------------------------------------------
# One-time weight preparation + K-tiling plan (no per-call HBM weight passes).
# --------------------------------------------------------------------------
def prepare_params(params, compute_dtype=jnp.bfloat16, vmem_cap=None,
                   k_tiles_override=None):
    w1, b1 = params["w1"], params["b1"]
    w2, b2 = params["w2"], params["b2"]
    w3, b3 = params["w3"], params["b3"]
    in_f, hid = w1.shape
    out_f = w3.shape[1]

    in_p = _round_up(in_f, LANE)
    out_p = _round_up(out_f, LANE)
    hid_p0 = _round_up(hid, LANE)

    cap = int(vmem_cap) if vmem_cap is not None else _tpu_vmem_bytes()
    budget = max(cap - (8 << 20), 24 << 20)     # leave Mosaic scratch headroom

    def weight_bytes(tk, k_tiles):
        nbuf = 1 if k_tiles == 1 else 2          # k-varying tiles double-buffered
        b = nbuf * (2 * in_p * tk + 2 * tk * in_p + 4 * tk)   # w1, w2, b1 tiles
        b += 2 * in_p * out_p + 4 * (in_p + out_p)            # w3, b2, b3 (1x)
        return b

    if k_tiles_override is not None:
        k_tiles = int(k_tiles_override)
        tk = _round_up(_cdiv(hid_p0, k_tiles), LANE)
    else:
        k_tiles, tk = 1, hid_p0
        # K-tile the hidden dim until the weight working set leaves >=25% of
        # the budget for activations (robust on v7x's 64 MiB VMEM).
        while weight_bytes(tk, k_tiles) > (budget * 3) // 4 and tk > LANE:
            k_tiles *= 2
            tk = _round_up(_cdiv(hid_p0, k_tiles), LANE)
    hid_p = tk * k_tiles                 # K tiles divide the padded hidden dim

    prepared = {
        "w1": jnp.pad(w1, ((0, in_p - in_f), (0, hid_p - hid))).astype(compute_dtype),
        "w2": jnp.pad(w2, ((0, hid_p - hid), (0, in_p - in_f))).astype(compute_dtype),
        "w3": jnp.pad(w3, ((0, in_p - in_f), (0, out_p - out_f))).astype(compute_dtype),
        "b1": jnp.pad(b1, ((0, 0), (0, hid_p - hid))).astype(jnp.float32),
        "b2": jnp.pad(b2, ((0, 0), (0, in_p - in_f))).astype(jnp.float32),
        "b3": jnp.pad(b3, ((0, 0), (0, out_p - out_f))).astype(jnp.float32),
    }
    meta = dict(in_f=in_f, hid=hid, out_f=out_f,
                in_p=in_p, hid_p=hid_p, out_p=out_p,
                tk=tk, k_tiles=k_tiles, cap=cap, budget=budget,
                compute_dtype=compute_dtype,
                weight_bytes=weight_bytes(tk, k_tiles))
    return prepared, meta


# --------------------------------------------------------------------------
# Forward pass wrapper.
# --------------------------------------------------------------------------
def custom_linear(x, prepared, meta, out_dtype=jnp.float32):
    B, in_f = x.shape
    assert in_f == meta["in_f"], (in_f, meta["in_f"])
    in_p, hid_p, out_p = meta["in_p"], meta["hid_p"], meta["out_p"]
    tk, k_tiles = meta["tk"], meta["k_tiles"]
    cap, budget = meta["cap"], meta["budget"]
    cdt = meta["compute_dtype"]

    # x: skip the wrapper HBM round trip when already lane-dense (cast happens
    # in-kernel); otherwise pad + cast once (bf16 halves the padded copy).
    if in_p == in_f:
        xp = x
    else:
        xp = jnp.pad(x, ((0, 0), (0, in_p - in_f))).astype(cdt)
    x_item = jnp.dtype(xp.dtype).itemsize

    # ---- batch tile selection --------------------------------------------
    per_row = (2 * x_item * in_p        # x tile (double-buffered)
               + 2 * 4 * out_p          # out tile (double-buffered, f32)
               + 4 * in_p               # f32 accumulator scratch
               + 6 * tk                 # h1 f32 + bf16 cast
               + 6 * in_p               # h2 f32 + bf16 cast
               + 4 * out_p)             # fc3 result before store
    avail = max(budget - meta["weight_bytes"], ROW * per_row)
    max_tile = 2048 if cap >= (100 << 20) else 512   # big tiles on v5e/v6e
    tile_b = min(max_tile, avail // per_row)
    tile_b = max(ROW, (tile_b // ROW) * ROW)
    # >=2 batch steps when possible so v7x's 2nd TensorCore gets work, and
    # never a tile wildly larger than the batch itself.
    tile_b = min(tile_b, max(ROW, _round_up(_cdiv(B, 2), ROW)))
    if B < ROW:                                   # tiny batches: exact block
        tile_b = _round_up(B, 8)

    n_b = _cdiv(B, tile_b)                        # ragged last block is masked
    grid = (n_b, k_tiles)

    act_bytes = tile_b * per_row
    vmem_limit = meta["weight_bytes"] + act_bytes + (8 << 20)
    vmem_limit = int(min(max(vmem_limit, 32 << 20), cap - (2 << 20)))

    flops = 2 * B * (in_p * hid_p + hid_p * in_p + in_p * out_p)
    bytes_accessed = (xp.size * x_item
                      + 2 * (in_p * hid_p + hid_p * in_p + in_p * out_p)
                      + 4 * (hid_p + in_p + out_p)
                      + B * out_p * 4)

    def _call(single_buffer):
        res = pl.Buffered(1) if single_buffer else None       # grid-invariant
        kv = res if k_tiles == 1 else None                    # k-varying tiles
        in_specs = [
            pl.BlockSpec((tile_b, in_p), lambda i, k: (i, 0)),             # x
            pl.BlockSpec((in_p, tk), lambda i, k: (0, k), pipeline_mode=kv),   # w1
            pl.BlockSpec((1, tk), lambda i, k: (0, k), pipeline_mode=kv),      # b1
            pl.BlockSpec((tk, in_p), lambda i, k: (k, 0), pipeline_mode=kv),   # w2
            pl.BlockSpec((1, in_p), lambda i, k: (0, 0), pipeline_mode=res),   # b2
            pl.BlockSpec((in_p, out_p), lambda i, k: (0, 0), pipeline_mode=res),  # w3
            pl.BlockSpec((1, out_p), lambda i, k: (0, 0), pipeline_mode=res),     # b3
        ]
        return pl.pallas_call(
            _mlp_kernel,
            out_shape=jax.ShapeDtypeStruct((B, out_p), out_dtype),
            grid=grid,
            in_specs=in_specs,
            out_specs=pl.BlockSpec((tile_b, out_p), lambda i, k: (i, 0)),
            scratch_shapes=[pltpu.VMEM((tile_b, in_p), jnp.float32)],
            compiler_params=pltpu.CompilerParams(
                dimension_semantics=("parallel", "arbitrary"),
                vmem_limit_bytes=vmem_limit,
            ),
            cost_estimate=pl.CostEstimate(
                flops=int(flops), transcendentals=0,
                bytes_accessed=int(bytes_accessed),
            ),
        )(xp, prepared["w1"], prepared["b1"], prepared["w2"], prepared["b2"],
          prepared["w3"], prepared["b3"])

    try:
        out = _call(True)
    except Exception:
        # pipeline_mode=Buffered(1) unsupported on this jax version: fall back
        # to default double-buffering (correct, slightly more VMEM).
        out = _call(False)

    return out[:, :meta["out_f"]]


# --------------------------------------------------------------------------
# Init / reference (nn.Linear semantics, weights stored [in, out]).
# --------------------------------------------------------------------------
def init_params(key, in_features, out_features, dtype=jnp.float32):
    hid = in_features * 2
    ks = jax.random.split(key, 6)

    def uni(k, shape, fan_in):
        bound = 1.0 / jnp.sqrt(float(fan_in))
        return jax.random.uniform(k, shape, dtype, minval=-bound, maxval=bound)

    return {
        "w1": uni(ks[0], (in_features, hid), in_features),
        "b1": uni(ks[1], (1, hid), in_features),
        "w2": uni(ks[2], (hid, in_features), hid),
        "b2": uni(ks[3], (1, in_features), hid),
        "w3": uni(ks[4], (in_features, out_features), in_features),
        "b3": uni(ks[5], (1, out_features), in_features),
    }


def reference(x, p):
    """f32 reference (dropout = identity, inference semantics)."""
    h1 = jnp.maximum(x @ p["w1"] + p["b1"], 0.0)
    h2 = jnp.maximum(h1 @ p["w2"] + p["b2"], 0.0)
    return h2 @ p["w3"] + p["b3"]


if __name__ == "__main__":
    key = jax.random.PRNGKey(0)
    kx, kp = jax.random.split(key)

    batch = 8
    in_features = 32
    out_features = 16

    x = jax.random.normal(kx, (batch, in_features), jnp.float32)
    params = init_params(kp, in_features, out_features)
    ref = reference(x, params)

    # Path 1: resident weights (k_tiles == 1).
    prepared, meta = prepare_params(params)
    out = custom_linear(x, prepared, meta)
    jax.block_until_ready(out)
    assert out.shape == (batch, out_features), out.shape
    assert jnp.allclose(out, ref, atol=5e-2, rtol=5e-2), \
        float(jnp.max(jnp.abs(out - ref)))

    # Path 2: K-tiled accumulator fallback (forced), exercises the v7x
    # large-weight code path at small shapes.
    prepared_k, meta_k = prepare_params(params, k_tiles_override=2)
    out_k = custom_linear(x, prepared_k, meta_k)
    jax.block_until_ready(out_k)
    assert jnp.allclose(out_k, ref, atol=5e-2, rtol=5e-2), \
        float(jnp.max(jnp.abs(out_k - ref)))

    print("KERNEL_OK")
</pallas_src>

<mosaic_0001>
module attributes {stable_mosaic.version = 11 : i64} {
  func.func @_mlp_kernel(%arg0: i32, %arg1: i32, %arg2: memref<8x128xbf16, #tpu.memory_space<vmem>>, %arg3: memref<128x128xbf16, #tpu.memory_space<vmem>>, %arg4: memref<1x128xf32, #tpu.memory_space<vmem>>, %arg5: memref<128x128xbf16, #tpu.memory_space<vmem>>, %arg6: memref<1x128xf32, #tpu.memory_space<vmem>>, %arg7: memref<128x128xbf16, #tpu.memory_space<vmem>>, %arg8: memref<1x128xf32, #tpu.memory_space<vmem>>, %arg9: memref<8x128xf32, #tpu.memory_space<vmem>>, %arg10: memref<8x128xf32, #tpu.memory_space<vmem>>) attributes {dimension_semantics = [#tpu.dimension_semantics<parallel>, #tpu.dimension_semantics<arbitrary>], iteration_bounds = array<i64: 1, 1>, scalar_prefetch = 0 : i64, scratch_operands = 1 : i64, tpu.core_type = #tpu.core_type<tc>, window_params = [{transform_indices = @transform_0, window_bounds = array<i64: 8, 128>}, {pipeline_mode = #tpu.pipeline_mode<synchronous>, transform_indices = @transform_1, window_bounds = array<i64: 128, 128>}, {pipeline_mode = #tpu.pipeline_mode<synchronous>, transform_indices = @transform_2, window_bounds = array<i64: 1, 128>}, {pipeline_mode = #tpu.pipeline_mode<synchronous>, transform_indices = @transform_3, window_bounds = array<i64: 128, 128>}, {pipeline_mode = #tpu.pipeline_mode<synchronous>, transform_indices = @transform_4, window_bounds = array<i64: 1, 128>}, {pipeline_mode = #tpu.pipeline_mode<synchronous>, transform_indices = @transform_5, window_bounds = array<i64: 128, 128>}, {pipeline_mode = #tpu.pipeline_mode<synchronous>, transform_indices = @transform_6, window_bounds = array<i64: 1, 128>}, {transform_indices = @transform_7, window_bounds = array<i64: 8, 128>}]} {
    %c0_i32 = arith.constant 0 : i32
    %0 = arith.cmpi eq, %arg1, %c0_i32 : i32
    %1 = arith.extui %0 : i1 to i32
    %c0_i32_0 = arith.constant 0 : i32
    %2 = arith.cmpi ne, %1, %c0_i32_0 : i32
    scf.if %2 {
      %cst_16 = arith.constant 0.000000e+00 : f32
      %20 = vector.broadcast %cst_16 : f32 to vector<8x128xf32>
      %c0_17 = arith.constant 0 : index
      %c0_18 = arith.constant 0 : index
      %21 = vector.load %arg10[%c0_17, %c0_18] : memref<8x128xf32, #tpu.memory_space<vmem>>, vector<8x128xf32>
      tpu.vector_store %arg10[%c0_17, %c0_18], %20 {strides = array<i32>} : memref<8x128xf32, #tpu.memory_space<vmem>>, vector<8x128xf32>,
    } else {
    }
    %c0 = arith.constant 0 : index
    %c0_1 = arith.constant 0 : index
    %3 = vector.load %arg2[%c0, %c0_1] : memref<8x128xbf16, #tpu.memory_space<vmem>>, vector<8x128xbf16>
    %c0_2 = arith.constant 0 : index
    %c0_3 = arith.constant 0 : index
    %4 = vector.load %arg3[%c0_2, %c0_3] : memref<128x128xbf16, #tpu.memory_space<vmem>>, vector<128x128xbf16>
    %cst = arith.constant dense<0.000000e+00> : vector<8x128xf32>
    %5 = tpu.matmul %3, %4, %cst {dimension_numbers = #tpu.dot_dimension_numbers<[1], [0], [0], [1], [0, 0, 1, 1], [], []>} : vector<8x128xbf16>, vector<128x128xbf16>, vector<8x128xf32> -> vector<8x128xf32>
    %c0_4 = arith.constant 0 : index
    %c0_5 = arith.constant 0 : index
    %6 = vector.load %arg4[%c0_4, %c0_5] : memref<1x128xf32, #tpu.memory_space<vmem>>, vector<1x128xf32>
    %7 = vector.broadcast %6 : vector<1x128xf32> to vector<8x128xf32>
    %8 = arith.addf %5, %7 : vector<8x128xf32>
    %cst_6 = arith.constant 0.000000e+00 : f32
    %9 = vector.broadcast %cst_6 : f32 to vector<8x128xf32>
    %10 = arith.maximumf %8, %9 : vector<8x128xf32>
    %c0_7 = arith.constant 0 : index
    %c0_8 = arith.constant 0 : index
    %11 = vector.load %arg10[%c0_7, %c0_8] : memref<8x128xf32, #tpu.memory_space<vmem>>, vector<8x128xf32>
    %12 = arith.truncf %10 : vector<8x128xf32> to vector<8x128xbf16>
    %c0_9 = arith.constant 0 : index
    %c0_10 = arith.constant 0 : index
    %13 = vector.load %arg5[%c0_9, %c0_10] : memref<128x128xbf16, #tpu.memory_space<vmem>>, vector<128x128xbf16>
    %cst_11 = arith.constant dense<0.000000e+00> : vector<8x128xf32>
    %14 = tpu.matmul %12, %13, %cst_11 {dimension_numbers = #tpu.dot_dimension_numbers<[1], [0], [0], [1], [0, 0, 1, 1], [], []>} : vector<8x128xbf16>, vector<128x128xbf16>, vector<8x128xf32> -> vector<8x128xf32>
    %15 = arith.addf %11, %14 : vector<8x128xf32>
    %c0_12 = arith.constant 0 : index
    %c0_13 = arith.constant 0 : index
    %16 = vector.load %arg10[%c0_12, %c0_13] : memref<8x128xf32, #tpu.memory_space<vmem>>, vector<8x128xf32>
    tpu.vector_store %arg10[%c0_12, %c0_13], %15 {strides = array<i32>} : memref<8x128xf32, #tpu.memory_space<vmem>>, vector<8x128xf32>,
    %c0_i32_14 = arith.constant 0 : i32
    %17 = arith.cmpi eq, %arg1, %c0_i32_14 : i32
    %18 = arith.extui %17 : i1 to i32
    %c0_i32_15 = arith.constant 0 : i32
    %19 = arith.cmpi ne, %18, %c0_i32_15 : i32
    scf.if %19 {
      %c0_16 = arith.constant 0 : index
      %c0_17 = arith.constant 0 : index
      %20 = vector.load %arg10[%c0_16, %c0_17] : memref<8x128xf32, #tpu.memory_space<vmem>>, vector<8x128xf32>
      %c0_18 = arith.constant 0 : index
      %c0_19 = arith.constant 0 : index
      %21 = vector.load %arg6[%c0_18, %c0_19] : memref<1x128xf32, #tpu.memory_space<vmem>>, vector<1x128xf32>
      %22 = vector.broadcast %21 : vector<1x128xf32> to vector<8x128xf32>
      %23 = arith.addf %20, %22 : vector<8x128xf32>
      %cst_20 = arith.constant 0.000000e+00 : f32
      %24 = vector.broadcast %cst_20 : f32 to vector<8x128xf32>
      %25 = arith.maximumf %23, %24 : vector<8x128xf32>
      %26 = arith.truncf %25 : vector<8x128xf32> to vector<8x128xbf16>
      %c0_21 = arith.constant 0 : index
      %c0_22 = arith.constant 0 : index
      %27 = vector.load %arg7[%c0_21, %c0_22] : memref<128x128xbf16, #tpu.memory_space<vmem>>, vector<128x128xbf16>
      %cst_23 = arith.constant dense<0.000000e+00> : vector<8x128xf32>
      %28 = tpu.matmul %26, %27, %cst_23 {dimension_numbers = #tpu.dot_dimension_numbers<[1], [0], [0], [1], [0, 0, 1, 1], [], []>} : vector<8x128xbf16>, vector<128x128xbf16>, vector<8x128xf32> -> vector<8x128xf32>
      %c0_24 = arith.constant 0 : index
      %c0_25 = arith.constant 0 : index
      %29 = vector.load %arg8[%c0_24, %c0_25] : memref<1x128xf32, #tpu.memory_space<vmem>>, vector<1x128xf32>
      %30 = vector.broadcast %29 : vector<1x128xf32> to vector<8x128xf32>
      %31 = arith.addf %28, %30 : vector<8x128xf32>
      %c0_26 = arith.constant 0 : index
      %c0_27 = arith.constant 0 : index
      %32 = vector.load %arg9[%c0_26, %c0_27] : memref<8x128xf32, #tpu.memory_space<vmem>>, vector<8x128xf32>
      tpu.vector_store %arg9[%c0_26, %c0_27], %31 {strides = array<i32>} : memref<8x128xf32, #tpu.memory_space<vmem>>, vector<8x128xf32>,
    } else {
    }
    return
  }
  func.func @transform_0(%arg0: i32, %arg1: i32) -> (i32, i32) {
    %c0_i32 = arith.constant 0 : i32
    %c0_i32_0 = arith.constant 0 : i32
    return %arg0, %c0_i32 : i32, i32
  }
  func.func @transform_1(%arg0: i32, %arg1: i32) -> (i32, i32) {
    %c0_i32 = arith.constant 0 : i32
    %c0_i32_0 = arith.constant 0 : i32
    return %c0_i32, %arg1 : i32, i32
  }
  func.func @transform_2(%arg0: i32, %arg1: i32) -> (i32, i32) {
    %c0_i32 = arith.constant 0 : i32
    %c0_i32_0 = arith.constant 0 : i32
    return %c0_i32, %arg1 : i32, i32
  }
  func.func @transform_3(%arg0: i32, %arg1: i32) -> (i32, i32) {
    %c0_i32 = arith.constant 0 : i32
    %c0_i32_0 = arith.constant 0 : i32
    return %arg1, %c0_i32 : i32, i32
  }
  func.func @transform_4(%arg0: i32, %arg1: i32) -> (i32, i32) {
    %c0_i32 = arith.constant 0 : i32
    %c0_i32_0 = arith.constant 0 : i32
    %c0_i32_1 = arith.constant 0 : i32
    return %c0_i32, %c0_i32_0 : i32, i32
  }
  func.func @transform_5(%arg0: i32, %arg1: i32) -> (i32, i32) {
    %c0_i32 = arith.constant 0 : i32
    %c0_i32_0 = arith.constant 0 : i32
    %c0_i32_1 = arith.constant 0 : i32
    return %c0_i32, %c0_i32_0 : i32, i32
  }
  func.func @transform_6(%arg0: i32, %arg1: i32) -> (i32, i32) {
    %c0_i32 = arith.constant 0 : i32
    %c0_i32_0 = arith.constant 0 : i32
    %c0_i32_1 = arith.constant 0 : i32
    return %c0_i32, %c0_i32_0 : i32, i32
  }
  func.func @transform_7(%arg0: i32, %arg1: i32) -> (i32, i32) {
    %c0_i32 = arith.constant 0 : i32
    %c0_i32_0 = arith.constant 0 : i32
    return %arg0, %c0_i32 : i32, i32
  }
}

module attributes {stable_mosaic.version = 11 : i64} {
  func.func @_mlp_kernel(%arg0: i32, %arg1: i32, %arg2: memref<8x128xbf16, #tpu.memory_space<vmem>>, %arg3: memref<128x128xbf16, #tpu.memory_space<vmem>>, %arg4: memref<1x128xf32, #tpu.memory_space<vmem>>, %arg5: memref<128x128xbf16, #tpu.memory_space<vmem>>, %arg6: memref<1x128xf32, #tpu.memory_space<vmem>>, %arg7: memref<128x128xbf16, #tpu.memory_space<vmem>>, %arg8: memref<1x128xf32, #tpu.memory_space<vmem>>, %arg9: memref<8x128xf32, #tpu.memory_space<vmem>>, %arg10: memref<8x128xf32, #tpu.memory_space<vmem>>) attributes {dimension_semantics = [#tpu.dimension_semantics<parallel>, #tpu.dimension_semantics<arbitrary>], iteration_bounds = array<i64: 1, 1>, scalar_prefetch = 0 : i64, scratch_operands = 1 : i64, tpu.core_type = #tpu.core_type<tc>, window_params = [{transform_indices = @transform_0, window_bounds = array<i64: 8, 128>}, {transform_indices = @transform_1, window_bounds = array<i64: 128, 128>}, {transform_indices = @transform_2, window_bounds = array<i64: 1, 128>}, {transform_indices = @transform_3, window_bounds = array<i64: 128, 128>}, {pipeline_mode = #tpu.pipeline_mode<synchronous>, transform_indices = @transform_4, window_bounds = array<i64: 1, 128>}, {pipeline_mode = #tpu.pipeline_mode<synchronous>, transform_indices = @transform_5, window_bounds = array<i64: 128, 128>}, {pipeline_mode = #tpu.pipeline_mode<synchronous>, transform_indices = @transform_6, window_bounds = array<i64: 1, 128>}, {transform_indices = @transform_7, window_bounds = array<i64: 8, 128>}]} {
    %c0_i32 = arith.constant 0 : i32
    %0 = arith.cmpi eq, %arg1, %c0_i32 : i32
    %1 = arith.extui %0 : i1 to i32
    %c0_i32_0 = arith.constant 0 : i32
    %2 = arith.cmpi ne, %1, %c0_i32_0 : i32
    scf.if %2 {
      %cst_16 = arith.constant 0.000000e+00 : f32
      %20 = vector.broadcast %cst_16 : f32 to vector<8x128xf32>
      %c0_17 = arith.constant 0 : index
      %c0_18 = arith.constant 0 : index
      %21 = vector.load %arg10[%c0_17, %c0_18] : memref<8x128xf32, #tpu.memory_space<vmem>>, vector<8x128xf32>
      tpu.vector_store %arg10[%c0_17, %c0_18], %20 {strides = array<i32>} : memref<8x128xf32, #tpu.memory_space<vmem>>, vector<8x128xf32>,
    } else {
    }
    %c0 = arith.constant 0 : index
    %c0_1 = arith.constant 0 : index
    %3 = vector.load %arg2[%c0, %c0_1] : memref<8x128xbf16, #tpu.memory_space<vmem>>, vector<8x128xbf16>
    %c0_2 = arith.constant 0 : index
    %c0_3 = arith.constant 0 : index
    %4 = vector.load %arg3[%c0_2, %c0_3] : memref<128x128xbf16, #tpu.memory_space<vmem>>, vector<128x128xbf16>
    %cst = arith.constant dense<0.000000e+00> : vector<8x128xf32>
    %5 = tpu.matmul %3, %4, %cst {dimension_numbers = #tpu.dot_dimension_numbers<[1], [0], [0], [1], [0, 0, 1, 1], [], []>} : vector<8x128xbf16>, vector<128x128xbf16>, vector<8x128xf32> -> vector<8x128xf32>
    %c0_4 = arith.constant 0 : index
    %c0_5 = arith.constant 0 : index
    %6 = vector.load %arg4[%c0_4, %c0_5] : memref<1x128xf32, #tpu.memory_space<vmem>>, vector<1x128xf32>
    %7 = vector.broadcast %6 : vector<1x128xf32> to vector<8x128xf32>
    %8 = arith.addf %5, %7 : vector<8x128xf32>
    %cst_6 = arith.constant 0.000000e+00 : f32
    %9 = vector.broadcast %cst_6 : f32 to vector<8x128xf32>
    %10 = arith.maximumf %8, %9 : vector<8x128xf32>
    %c0_7 = arith.constant 0 : index
    %c0_8 = arith.constant 0 : index
    %11 = vector.load %arg10[%c0_7, %c0_8] : memref<8x128xf32, #tpu.memory_space<vmem>>, vector<8x128xf32>
    %12 = arith.truncf %10 : vector<8x128xf32> to vector<8x128xbf16>
    %c0_9 = arith.constant 0 : index
    %c0_10 = arith.constant 0 : index
    %13 = vector.load %arg5[%c0_9, %c0_10] : memref<128x128xbf16, #tpu.memory_space<vmem>>, vector<128x128xbf16>
    %cst_11 = arith.constant dense<0.000000e+00> : vector<8x128xf32>
    %14 = tpu.matmul %12, %13, %cst_11 {dimension_numbers = #tpu.dot_dimension_numbers<[1], [0], [0], [1], [0, 0, 1, 1], [], []>} : vector<8x128xbf16>, vector<128x128xbf16>, vector<8x128xf32> -> vector<8x128xf32>
    %15 = arith.addf %11, %14 : vector<8x128xf32>
    %c0_12 = arith.constant 0 : index
    %c0_13 = arith.constant 0 : index
    %16 = vector.load %arg10[%c0_12, %c0_13] : memref<8x128xf32, #tpu.memory_space<vmem>>, vector<8x128xf32>
    tpu.vector_store %arg10[%c0_12, %c0_13], %15 {strides = array<i32>} : memref<8x128xf32, #tpu.memory_space<vmem>>, vector<8x128xf32>,
    %c0_i32_14 = arith.constant 0 : i32
    %17 = arith.cmpi eq, %arg1, %c0_i32_14 : i32
    %18 = arith.extui %17 : i1 to i32
    %c0_i32_15 = arith.constant 0 : i32
    %19 = arith.cmpi ne, %18, %c0_i32_15 : i32
    scf.if %19 {
      %c0_16 = arith.constant 0 : index
      %c0_17 = arith.constant 0 : index
      %20 = vector.load %arg10[%c0_16, %c0_17] : memref<8x128xf32, #tpu.memory_space<vmem>>, vector<8x128xf32>
      %c0_18 = arith.constant 0 : index
      %c0_19 = arith.constant 0 : index
      %21 = vector.load %arg6[%c0_18, %c0_19] : memref<1x128xf32, #tpu.memory_space<vmem>>, vector<1x128xf32>
      %22 = vector.broadcast %21 : vector<1x128xf32> to vector<8x128xf32>
      %23 = arith.addf %20, %22 : vector<8x128xf32>
      %cst_20 = arith.constant 0.000000e+00 : f32
      %24 = vector.broadcast %cst_20 : f32 to vector<8x128xf32>
      %25 = arith.maximumf %23, %24 : vector<8x128xf32>
      %26 = arith.truncf %25 : vector<8x128xf32> to vector<8x128xbf16>
      %c0_21 = arith.constant 0 : index
      %c0_22 = arith.constant 0 : index
      %27 = vector.load %arg7[%c0_21, %c0_22] : memref<128x128xbf16, #tpu.memory_space<vmem>>, vector<128x128xbf16>
      %cst_23 = arith.constant dense<0.000000e+00> : vector<8x128xf32>
      %28 = tpu.matmul %26, %27, %cst_23 {dimension_numbers = #tpu.dot_dimension_numbers<[1], [0], [0], [1], [0, 0, 1, 1], [], []>} : vector<8x128xbf16>, vector<128x128xbf16>, vector<8x128xf32> -> vector<8x128xf32>
      %c0_24 = arith.constant 0 : index
      %c0_25 = arith.constant 0 : index
      %29 = vector.load %arg8[%c0_24, %c0_25] : memref<1x128xf32, #tpu.memory_space<vmem>>, vector<1x128xf32>
      %30 = vector.broadcast %29 : vector<1x128xf32> to vector<8x128xf32>
      %31 = arith.addf %28, %30 : vector<8x128xf32>
      %c0_26 = arith.constant 0 : index
      %c0_27 = arith.constant 0 : index
      %32 = vector.load %arg9[%c0_26, %c0_27] : memref<8x128xf32, #tpu.memory_space<vmem>>, vector<8x128xf32>
      tpu.vector_store %arg9[%c0_26, %c0_27], %31 {strides = array<i32>} : memref<8x128xf32, #tpu.memory_space<vmem>>, vector<8x128xf32>,
    } else {
    }
    return
  }
  func.func @transform_0(%arg0: i32, %arg1: i32) -> (i32, i32) {
    %c0_i32 = arith.constant 0 : i32
    %c0_i32_0 = arith.constant 0 : i32
    return %arg0, %c0_i32 : i32, i32
  }
  func.func @transform_1(%arg0: i32, %arg1: i32) -> (i32, i32) {
    %c0_i32 = arith.constant 0 : i32
    %c0_i32_0 = arith.constant 0 : i32
    return %c0_i32, %arg1 : i32, i32
  }
  func.func @transform_2(%arg0: i32, %arg1: i32) -> (i32, i32) {
    %c0_i32 = arith.constant 0 : i32
    %c0_i32_0 = arith.constant 0 : i32
    return %c0_i32, %arg1 : i32, i32
  }
  func.func @transform_3(%arg0: i32, %arg1: i32) -> (i32, i32) {
    %c0_i32 = arith.constant 0 : i32
    %c0_i32_0 = arith.constant 0 : i32
    return %arg1, %c0_i32 : i32, i32
  }
  func.func @transform_4(%arg0: i32, %arg1: i32) -> (i32, i32) {
    %c0_i32 = arith.constant 0 : i32
    %c0_i32_0 = arith.constant 0 : i32
    %c0_i32_1 = arith.constant 0 : i32
    return %c0_i32, %c0_i32_0 : i32, i32
  }
  func.func @transform_5(%arg0: i32, %arg1: i32) -> (i32, i32) {
    %c0_i32 = arith.constant 0 : i32
    %c0_i32_0 = arith.constant 0 : i32
    %c0_i32_1 = arith.constant 0 : i32
    return %c0_i32, %c0_i32_0 : i32, i32
  }
  func.func @transform_6(%arg0: i32, %arg1: i32) -> (i32, i32) {
    %c0_i32 = arith.constant 0 : i32
    %c0_i32_0 = arith.constant 0 : i32
    %c0_i32_1 = arith.constant 0 : i32
    return %c0_i32, %c0_i32_0 : i32, i32
  }
  func.func @transform_7(%arg0: i32, %arg1: i32) -> (i32, i32) {
    %c0_i32 = arith.constant 0 : i32
    %c0_i32_0 = arith.constant 0 : i32
    return %arg0, %c0_i32 : i32, i32
  }
}

</mosaic_0001>

<llo_original>
// kernel: tpu_custom_call.1
$region0: #{tpu_custom_call.1}
  #allocation0 [shape = 'u32[]', space=smem, size = 0x4, offset = 0x4, fixed_abs, tag = 'smem constant byte address 0x4 - core index']
  #allocation1 [shape = 'u32[144,128]{1,0:T(1,128)}', space=vmem, size = 0x12000, scoped, tag = 'internal scratch']
  #allocation2 [shape = 'f32[8,128]{1,0:T(8,128)}', space=vmem, size = 0x1000, scoped, tag = 'scratch operand']
  %s0 = inlined_call_operand.hbm [shape: bf16[8,128], index: 0, kind: input, shape index: {}]
  %s1 = inlined_call_operand.hbm [shape: bf16[128,128], index: 1, kind: input, shape index: {}]
  %s2 = inlined_call_operand.vmem [shape: f32[1,128], index: 2, kind: input, shape index: {}]
  %s3 = inlined_call_operand.hbm [shape: bf16[128,128], index: 3, kind: input, shape index: {}]
  %s4 = inlined_call_operand.vmem [shape: f32[1,128], index: 4, kind: input, shape index: {}]
  %s5 = inlined_call_operand.hbm [shape: bf16[128,128], index: 5, kind: input, shape index: {}]
  %s6 = inlined_call_operand.vmem [shape: f32[1,128], index: 6, kind: input, shape index: {}]
  %s7 = inlined_call_operand.hbm [shape: f32[8,128], index: 7, kind: output, shape index: {}]
  %s8 = sld [smem:[#allocation0]]
  $region62: #{tpu_custom_call.1} parent=0
    _
  %s10 = ssub.s32 1, %s8
  %s11 = scalar_select 0, %s10, %s8
  $region1: #{tpu_custom_call.1} parent=0
    #allocation3 [shape = 'u8[2048]{0}', space=vmem, size = 0x800, scoped, tag = 'input window, operand 0, single buffered']
    #allocation4 [shape = 's32[1]{0}', space=sflag, size = 0x4, scoped, tag = 'scoped memory for tpu_custom_call.1']
    #allocation5 [shape = 's32[1]{0}', space=sflag, size = 0x4, scoped, tag = 'scoped memory for tpu_custom_call.1']
    #allocation6 [shape = 'u8[32768]{0}', space=vmem, size = 0x8000, scoped, tag = 'input window, operand 1, single buffered']
    #allocation7 [shape = 's32[1]{0}', space=sflag, size = 0x4, scoped, tag = 'scoped memory for tpu_custom_call.1']
    #allocation8 [shape = 'u8[32768]{0}', space=vmem, size = 0x8000, scoped, tag = 'input window, operand 3, single buffered']
    #allocation9 [shape = 'u8[32768]{0}', space=vmem, size = 0x8000, scoped, tag = 'input window, operand 5, single buffered']
    #allocation10 [shape = 's32[1]{0}', space=sflag, size = 0x4, scoped, tag = 'scoped memory for tpu_custom_call.1']
    #allocation11 [shape = 'u8[4096]{0}', space=vmem, size = 0x1000, scoped, tag = 'output window, operand 0, single buffered']
    %12 = vsyncpa [#allocation4], 0
    %13 = vsyncpa [#allocation7], 0
    %14 = vsyncpa [#allocation10], 0
    %15 = vsyncpa [#allocation5], 0
    // Predicated region
    $region2: #{tpu_custom_call.1} parent=1 // pred_check
      _
    $region3: #{tpu_custom_call.1} parent=1 // pred_check_branch
      %17 = sbr.rel (0) target = $region5
    $region4: #{tpu_custom_call.1} parent=1 // pred_region
      %s19 = ssub.s32 64, 64
      %20 = vsyncadd [#allocation4], %s19
      %s22 = sshll.u32 [#allocation3], 4
      %s23 = int_to_ptr.vmem [resolvable:$true] %s22
      %25 = dma.hbm_to_vmem [thread:$0]  %s0, 64, %s23, [#allocation4]
    $region5: #{tpu_custom_call.1} parent=1 // pred_fallthru
      _
    // Predicated region
    $region6: #{tpu_custom_call.1} parent=1 // pred_check
      _
    $region7: #{tpu_custom_call.1} parent=1 // pred_check_branch
      %27 = sbr.rel (0) target = $region9
    $region8: #{tpu_custom_call.1} parent=1 // pred_region
      %s29 = ssub.s32 1024, 1024
      %30 = vsyncadd [#allocation7], %s29
      %s31 = sshll.u32 [#allocation6], 4
      %s32 = int_to_ptr.vmem [resolvable:$true] %s31
      %37 = dma.hbm_to_vmem [thread:$0]  %s1, 1024, %s32, [#allocation7], 64, 64, 4
    $region9: #{tpu_custom_call.1} parent=1 // pred_fallthru
      _
    // Predicated region
    $region10: #{tpu_custom_call.1} parent=1 // pred_check
      _
    $region11: #{tpu_custom_call.1} parent=1 // pred_check_branch
      %39 = sbr.rel (0) target = $region13
    $region12: #{tpu_custom_call.1} parent=1 // pred_region
      _
    $region13: #{tpu_custom_call.1} parent=1 // pred_fallthru
      _
    // Predicated region
    $region14: #{tpu_custom_call.1} parent=1 // pred_check
      _
    $region15: #{tpu_custom_call.1} parent=1 // pred_check_branch
      %41 = sbr.rel (0) target = $region17
    $region16: #{tpu_custom_call.1} parent=1 // pred_region
      %s43 = ssub.s32 1024, 1024
      %44 = vsyncadd [#allocation7], %s43
      %s45 = sshll.u32 [#allocation8], 4
      %s46 = int_to_ptr.vmem [resolvable:$true] %s45
      %51 = dma.hbm_to_vmem [thread:$0]  %s3, 1024, %s46, [#allocation7], 64, 64, 4
    $region17: #{tpu_custom_call.1} parent=1 // pred_fallthru
      _
    // Predicated region
    $region18: #{tpu_custom_call.1} parent=1 // pred_check
      _
    $region19: #{tpu_custom_call.1} parent=1 // pred_check_branch
      %53 = sbr.rel (0) target = $region21
    $region20: #{tpu_custom_call.1} parent=1 // pred_region
      _
    $region21: #{tpu_custom_call.1} parent=1 // pred_fallthru
      _
    // Predicated region
    $region22: #{tpu_custom_call.1} parent=1 // pred_check
      _
    $region23: #{tpu_custom_call.1} parent=1 // pred_check_branch
      %55 = sbr.rel (0) target = $region25
    $region24: #{tpu_custom_call.1} parent=1 // pred_region
      %s57 = ssub.s32 1024, 1024
      %58 = vsyncadd [#allocation10], %s57
      %s59 = sshll.u32 [#allocation9], 4
      %s60 = int_to_ptr.vmem [resolvable:$true] %s59
      %65 = dma.hbm_to_vmem [thread:$0]  %s5, 1024, %s60, [#allocation10], 64, 64, 4
    $region25: #{tpu_custom_call.1} parent=1 // pred_fallthru
      _
    // Predicated region
    $region26: #{tpu_custom_call.1} parent=1 // pred_check
      _
    $region27: #{tpu_custom_call.1} parent=1 // pred_check_branch
      %67 = sbr.rel (0) target = $region29
    $region28: #{tpu_custom_call.1} parent=1 // pred_region
      _
    $region29: #{tpu_custom_call.1} parent=1 // pred_fallthru
      _
    // Predicated region
    $region30: #{tpu_custom_call.1} parent=1 // pred_check
      _
    $region31: #{tpu_custom_call.1} parent=1 // pred_check_branch
      %69 = sbr.rel (0) target = $region33
    $region32: #{tpu_custom_call.1} parent=1 // pred_region
      %70 = dma.done [#allocation4], 64
    $region33: #{tpu_custom_call.1} parent=1 // pred_fallthru
      _
    // Predicated region
    $region34: #{tpu_custom_call.1} parent=1 // pred_check
      _
    $region35: #{tpu_custom_call.1} parent=1 // pred_check_branch
      %72 = sbr.rel (0) target = $region37
    $region36: #{tpu_custom_call.1} parent=1 // pred_region
      %73 = dma.done [#allocation7], 1024
    $region37: #{tpu_custom_call.1} parent=1 // pred_fallthru
      _
    // Predicated region
    $region38: #{tpu_custom_call.1} parent=1 // pred_check
      _
    $region39: #{tpu_custom_call.1} parent=1 // pred_check_branch
      %75 = sbr.rel (0) target = $region41
    $region40: #{tpu_custom_call.1} parent=1 // pred_region
      %76 = dma.done [#allocation7], 1024
    $region41: #{tpu_custom_call.1} parent=1 // pred_fallthru
      _
    // Predicated region
    $region42: #{tpu_custom_call.1} parent=1 // pred_check
      _
    $region43: #{tpu_custom_call.1} parent=1 // pred_check_branch
      %78 = sbr.rel (0) target = $region45
    $region44: #{tpu_custom_call.1} parent=1 // pred_region
      %79 = dma.done [#allocation10], 1024
    $region45: #{tpu_custom_call.1} parent=1 // pred_fallthru
      _
    %p81 = scmp.eq.s32.totalorder 0, 0
    // Predicated region
    $region46: #{tpu_custom_call.1} parent=1 // pred_check
      %p82 = pneg %p81
    $region47: #{tpu_custom_call.1} parent=1 // pred_check_branch
      %84 = sbr.rel (%p82) target = $region49
    $region48: #{tpu_custom_call.1} parent=1 // pred_region
      %85 = vst [vmem:[#allocation2] sm:$0xff] 0.0
    $region49: #{tpu_custom_call.1} parent=1 // pred_fallthru
      _
    %v86 = vld [vmem:[#allocation3] sm:$0xf]
    %v87 = vld [vmem:[#allocation6] sm:$0xf]
    %v88 = vld [vmem:[#allocation6 + $0x4] sm:$0xf]
    %v89 = vld [vmem:[#allocation6 + $0x8] sm:$0xf]
    %v90 = vld [vmem:[#allocation6 + $0xc] sm:$0xf]
    %v91 = vld [vmem:[#allocation6 + $0x10] sm:$0xf]
    %v92 = vld [vmem:[#allocation6 + $0x14] sm:$0xf]
    %v93 = vld [vmem:[#allocation6 + $0x18] sm:$0xf]
    %v94 = vld [vmem:[#allocation6 + $0x1c] sm:$0xf]
    %v95 = vld [vmem:[#allocation6 + $0x20] sm:$0xf]
    %v96 = vld [vmem:[#allocation6 + $0x24] sm:$0xf]
    %v97 = vld [vmem:[#allocation6 + $0x28] sm:$0xf]
    %v98 = vld [vmem:[#allocation6 + $0x2c] sm:$0xf]
    %v99 = vld [vmem:[#allocation6 + $0x30] sm:$0xf]
    %v100 = vld [vmem:[#allocation6 + $0x34] sm:$0xf]
    %v101 = vld [vmem:[#allocation6 + $0x38] sm:$0xf]
    %v102 = vld [vmem:[#allocation6 + $0x3c] sm:$0xf]
    %v103 = vld [vmem:[%s2] sm:$0x1]
    %v105 = vlaneseq
    %v106 = vshrl.u32 %v105, 7
    %v107 = vsub.s32 0, %v106
    %v108 = vrot.slane %v103, %v107
    %v126 = vunpack.c.l.b16 %v87
    %v127 = vunpack.c.l.b16 %v88
    %v128 = vunpack.c.l.b16 %v89
    %v129 = vunpack.c.l.b16 %v90
    %v130 = vunpack.c.l.b16 %v91
    %v131 = vunpack.c.l.b16 %v92
    %v132 = vunpack.c.l.b16 %v93
    %v133 = vunpack.c.l.b16 %v94
    %v134 = vunpack.c.l.b16 %v95
    %v135 = vunpack.c.l.b16 %v96
    %v136 = vunpack.c.l.b16 %v97
    %v137 = vunpack.c.l.b16 %v98
    %v138 = vunpack.c.l.b16 %v99
    %v139 = vunpack.c.l.b16 %v100
    %v140 = vunpack.c.l.b16 %v101
    %v141 = vunpack.c.l.b16 %v102
    %v142 = vpack.c.b16 %v127, %v126
    %v143 = vpack.c.b16 %v129, %v128
    %v144 = vpack.c.b16 %v131, %v130
    %v145 = vpack.c.b16 %v133, %v132
    %v146 = vpack.c.b16 %v135, %v134
    %v147 = vpack.c.b16 %v137, %v136
    %v148 = vpack.c.b16 %v139, %v138
    %v149 = vpack.c.b16 %v141, %v140
    %158 = vmatprep.subr.bf16.mxu0 0
    %159 = vmatpush1.bf16.msra.mxu0 %v142
    %160 = vmatprep.subr.bf16.mxu0 0
    %161 = vmatpush1.bf16.msra.mxu0 %v143
    %162 = vmatprep.subr.bf16.mxu0 0
    %163 = vmatpush1.bf16.msra.mxu0 %v144
    %164 = vmatprep.subr.bf16.mxu0 0
    %165 = vmatpush1.bf16.msra.mxu0 %v145
    %166 = vmatprep.subr.bf16.mxu0 0
    %167 = vmatpush1.bf16.msra.mxu0 %v146
    %168 = vmatprep.subr.bf16.mxu0 0
    %169 = vmatpush1.bf16.msra.mxu0 %v147
    %170 = vmatprep.subr.bf16.mxu0 0
    %171 = vmatpush1.bf16.msra.mxu0 %v148
    %172 = vmatprep.subr.bf16.mxu0 0
    %173 = vmatpush1.bf16.msra.mxu0 %v149
    %174 = vmatprep.subr.bf16.mxu0 0
    %175 = vmatpush1.bf16.msra.mxu0 0
    %176 = vmatprep.subr.bf16.mxu0 0
    %177 = vmatpush1.bf16.msra.mxu0 0
    %178 = vmatprep.subr.bf16.mxu0 0
    %179 = vmatpush1.bf16.msra.mxu0 0
    %180 = vmatprep.subr.bf16.mxu0 0
    %181 = vmatpush1.bf16.msra.mxu0 0
    %182 = vmatprep.subr.bf16.mxu0 0
    %183 = vmatpush1.bf16.msra.mxu0 0
    %184 = vmatprep.subr.bf16.mxu0 0
    %185 = vmatpush1.bf16.msra.mxu0 0
    %186 = vmatprep.subr.bf16.mxu0 0
    %187 = vmatpush1.bf16.msra.mxu0 0
    %188 = vmatprep.subr.bf16.mxu0 0
    %189 = vmatpush1.bf16.msra.mxu0 0
    %190 = vmatprep.mubr.bf16.mxu0 0
    %191 = vmatmul.mubr.bf16.gmra.mrb[0].mxu0 %v86
    %v192 = vpop.f32.mrb[0].mxu0
    %v193 = vadd.f32 %v108, %v192
    %v194 = vpop.f32.mrb[0].mxu0
    %v195 = vpop.f32.mrb[0].mxu0
    %v196 = vpop.f32.mrb[0].mxu0
    %197 = vdwg.mxu0
    %v198 = vmax.f32 %v193, 0.0
    %v199 = vld [vmem:[#allocation2] sm:$0xff]
    %v200 = vpack.c.bf16 %v198, %v198
    %v201 = vld [vmem:[#allocation8] sm:$0xf]
    %v202 = vld [vmem:[#allocation8 + $0x4] sm:$0xf]
    %v203 = vld [vmem:[#allocation8 + $0x8] sm:$0xf]
    %v204 = vld [vmem:[#allocation8 + $0xc] sm:$0xf]
    %v205 = vld [vmem:[#allocation8 + $0x10] sm:$0xf]
    %v206 = vld [vmem:[#allocation8 + $0x14] sm:$0xf]
    %v207 = vld [vmem:[#allocation8 + $0x18] sm:$0xf]
    %v208 = vld [vmem:[#allocation8 + $0x1c] sm:$0xf]
    %v209 = vld [vmem:[#allocation8 + $0x20] sm:$0xf]
    %v210 = vld [vmem:[#allocation8 + $0x24] sm:$0xf]
    %v211 = vld [vmem:[#allocation8 + $0x28] sm:$0xf]
    %v212 = vld [vmem:[#allocation8 + $0x2c] sm:$0xf]
    %v213 = vld [vmem:[#allocation8 + $0x30] sm:$0xf]
    %v214 = vld [vmem:[#allocation8 + $0x34] sm:$0xf]
    %v215 = vld [vmem:[#allocation8 + $0x38] sm:$0xf]
    %v216 = vld [vmem:[#allocation8 + $0x3c] sm:$0xf]
    %v233 = vunpack.c.l.b16 %v201
    %v234 = vunpack.c.l.b16 %v202
    %v235 = vunpack.c.l.b16 %v203
    %v236 = vunpack.c.l.b16 %v204
    %v237 = vunpack.c.l.b16 %v205
    %v238 = vunpack.c.l.b16 %v206
    %v239 = vunpack.c.l.b16 %v207
    %v240 = vunpack.c.l.b16 %v208
    %v241 = vunpack.c.l.b16 %v209
    %v242 = vunpack.c.l.b16 %v210
    %v243 = vunpack.c.l.b16 %v211
    %v244 = vunpack.c.l.b16 %v212
    %v245 = vunpack.c.l.b16 %v213
    %v246 = vunpack.c.l.b16 %v214
    %v247 = vunpack.c.l.b16 %v215
    %v248 = vunpack.c.l.b16 %v216
    %v249 = vpack.c.b16 %v234, %v233
    %v250 = vpack.c.b16 %v236, %v235
    %v251 = vpack.c.b16 %v238, %v237
    %v252 = vpack.c.b16 %v240, %v239
    %v253 = vpack.c.b16 %v242, %v241
    %v254 = vpack.c.b16 %v244, %v243
    %v255 = vpack.c.b16 %v246, %v245
    %v256 = vpack.c.b16 %v248, %v247
    %265 = vmatprep.subr.bf16.mxu0 0
    %266 = vmatpush1.bf16.msra.mxu0 %v249
    %267 = vmatprep.subr.bf16.mxu0 0
    %268 = vmatpush1.bf16.msra.mxu0 %v250
    %269 = vmatprep.subr.bf16.mxu0 0
    %270 = vmatpush1.bf16.msra.mxu0 %v251
    %271 = vmatprep.subr.bf16.mxu0 0
    %272 = vmatpush1.bf16.msra.mxu0 %v252
    %273 = vmatprep.subr.bf16.mxu0 0
    %274 = vmatpush1.bf16.msra.mxu0 %v253
    %275 = vmatprep.subr.bf16.mxu0 0
    %276 = vmatpush1.bf16.msra.mxu0 %v254
    %277 = vmatprep.subr.bf16.mxu0 0
    %278 = vmatpush1.bf16.msra.mxu0 %v255
    %279 = vmatprep.subr.bf16.mxu0 0
    %280 = vmatpush1.bf16.msra.mxu0 %v256
    %281 = vmatprep.subr.bf16.mxu0 0
    %282 = vmatpush1.bf16.msra.mxu0 0
    %283 = vmatprep.subr.bf16.mxu0 0
    %284 = vmatpush1.bf16.msra.mxu0 0
    %285 = vmatprep.subr.bf16.mxu0 0
    %286 = vmatpush1.bf16.msra.mxu0 0
    %287 = vmatprep.subr.bf16.mxu0 0
    %288 = vmatpush1.bf16.msra.mxu0 0
    %289 = vmatprep.subr.bf16.mxu0 0
    %290 = vmatpush1.bf16.msra.mxu0 0
    %291 = vmatprep.subr.bf16.mxu0 0
    %292 = vmatpush1.bf16.msra.mxu0 0
    %293 = vmatprep.subr.bf16.mxu0 0
    %294 = vmatpush1.bf16.msra.mxu0 0
    %295 = vmatprep.subr.bf16.mxu0 0
    %296 = vmatpush1.bf16.msra.mxu0 0
    %297 = vmatprep.mubr.bf16.mxu0 0
    %298 = vmatmul.mubr.bf16.gmra.mrb[0].mxu0 %v200
    %v299 = vpop.f32.mrb[0].mxu0
    %v300 = vadd.f32 0.0, %v299
    %v301 = vpop.f32.mrb[0].mxu0
    %v302 = vpop.f32.mrb[0].mxu0
    %v303 = vpop.f32.mrb[0].mxu0
    %304 = vdwg.mxu0
    %v305 = vadd.f32 %v199, %v300
    %306 = vst [vmem:[#allocation2] sm:$0xff] %v305
    // Predicated region
    $region50: #{tpu_custom_call.1} parent=1 // pred_check
      %p307 = pneg %p81
    $region51: #{tpu_custom_call.1} parent=1 // pred_check_branch
      %309 = sbr.rel (%p307) target = $region53
    $region52: #{tpu_custom_call.1} parent=1 // pred_region
      %v310 = vld [vmem:[#allocation2] sm:$0xff]
      %v311 = vld [vmem:[%s4] sm:$0x1]
      %v313 = vlaneseq
      %v314 = vshrl.u32 %v313, 7
      %v315 = vsub.s32 0, %v314
      %v316 = vrot.slane %v311, %v315
      %v318 = vadd.f32 %v310, %v316
      %v319 = vmax.f32 %v318, 0.0
      %v320 = vpack.c.bf16 %v319, %v319
      %v321 = vld [vmem:[#allocation9] sm:$0xf]
      %v322 = vld [vmem:[#allocation9 + $0x4] sm:$0xf]
      %v323 = vld [vmem:[#allocation9 + $0x8] sm:$0xf]
      %v324 = vld [vmem:[#allocation9 + $0xc] sm:$0xf]
      %v325 = vld [vmem:[#allocation9 + $0x10] sm:$0xf]
      %v326 = vld [vmem:[#allocation9 + $0x14] sm:$0xf]
      %v327 = vld [vmem:[#allocation9 + $0x18] sm:$0xf]
      %v328 = vld [vmem:[#allocation9 + $0x1c] sm:$0xf]
      %v329 = vld [vmem:[#allocation9 + $0x20] sm:$0xf]
      %v330 = vld [vmem:[#allocation9 + $0x24] sm:$0xf]
      %v331 = vld [vmem:[#allocation9 + $0x28] sm:$0xf]
      %v332 = vld [vmem:[#allocation9 + $0x2c] sm:$0xf]
      %v333 = vld [vmem:[#allocation9 + $0x30] sm:$0xf]
      %v334 = vld [vmem:[#allocation9 + $0x34] sm:$0xf]
      %v335 = vld [vmem:[#allocation9 + $0x38] sm:$0xf]
      %v336 = vld [vmem:[#allocation9 + $0x3c] sm:$0xf]
      %v337 = vld [vmem:[%s6] sm:$0x1]
      %v339 = vlaneseq
      %v340 = vshrl.u32 %v339, 7
      %v341 = vsub.s32 0, %v340
      %v342 = vrot.slane %v337, %v341
      %v360 = vunpack.c.l.b16 %v321
      %v361 = vunpack.c.l.b16 %v322
      %v362 = vunpack.c.l.b16 %v323
      %v363 = vunpack.c.l.b16 %v324
      %v364 = vunpack.c.l.b16 %v325
      %v365 = vunpack.c.l.b16 %v326
      %v366 = vunpack.c.l.b16 %v327
      %v367 = vunpack.c.l.b16 %v328
      %v368 = vunpack.c.l.b16 %v329
      %v369 = vunpack.c.l.b16 %v330
      %v370 = vunpack.c.l.b16 %v331
      %v371 = vunpack.c.l.b16 %v332
      %v372 = vunpack.c.l.b16 %v333
      %v373 = vunpack.c.l.b16 %v334
      %v374 = vunpack.c.l.b16 %v335
      %v375 = vunpack.c.l.b16 %v336
      %v376 = vpack.c.b16 %v361, %v360
      %v377 = vpack.c.b16 %v363, %v362
      %v378 = vpack.c.b16 %v365, %v364
      %v379 = vpack.c.b16 %v367, %v366
      %v380 = vpack.c.b16 %v369, %v368
      %v381 = vpack.c.b16 %v371, %v370
      %v382 = vpack.c.b16 %v373, %v372
      %v383 = vpack.c.b16 %v375, %v374
      %392 = vmatprep.subr.bf16.mxu0 0
      %393 = vmatpush1.bf16.msra.mxu0 %v376
      %394 = vmatprep.subr.bf16.mxu0 0
      %395 = vmatpush1.bf16.msra.mxu0 %v377
      %396 = vmatprep.subr.bf16.mxu0 0
      %397 = vmatpush1.bf16.msra.mxu0 %v378
      %398 = vmatprep.subr.bf16.mxu0 0
      %399 = vmatpush1.bf16.msra.mxu0 %v379
      %400 = vmatprep.subr.bf16.mxu0 0
      %401 = vmatpush1.bf16.msra.mxu0 %v380
      %402 = vmatprep.subr.bf16.mxu0 0
      %403 = vmatpush1.bf16.msra.mxu0 %v381
      %404 = vmatprep.subr.bf16.mxu0 0
      %405 = vmatpush1.bf16.msra.mxu0 %v382
      %406 = vmatprep.subr.bf16.mxu0 0
      %407 = vmatpush1.bf16.msra.mxu0 %v383
      %408 = vmatprep.subr.bf16.mxu0 0
      %409 = vmatpush1.bf16.msra.mxu0 0
      %410 = vmatprep.subr.bf16.mxu0 0
      %411 = vmatpush1.bf16.msra.mxu0 0
      %412 = vmatprep.subr.bf16.mxu0 0
      %413 = vmatpush1.bf16.msra.mxu0 0
      %414 = vmatprep.subr.bf16.mxu0 0
      %415 = vmatpush1.bf16.msra.mxu0 0
      %416 = vmatprep.subr.bf16.mxu0 0
      %417 = vmatpush1.bf16.msra.mxu0 0
      %418 = vmatprep.subr.bf16.mxu0 0
      %419 = vmatpush1.bf16.msra.mxu0 0
      %420 = vmatprep.subr.bf16.mxu0 0
      %421 = vmatpush1.bf16.msra.mxu0 0
      %422 = vmatprep.subr.bf16.mxu0 0
      %423 = vmatpush1.bf16.msra.mxu0 0
      %424 = vmatprep.mubr.bf16.mxu0 0
      %425 = vmatmul.mubr.bf16.gmra.mrb[0].mxu0 %v320
      %v426 = vpop.f32.mrb[0].mxu0
      %v427 = vadd.f32 %v342, %v426
      %v428 = vpop.f32.mrb[0].mxu0
      %v429 = vpop.f32.mrb[0].mxu0
      %v430 = vpop.f32.mrb[0].mxu0
      %431 = vdwg.mxu0
      %432 = vst [vmem:[#allocation11] sm:$0xff] %v427
    $region53: #{tpu_custom_call.1} parent=1 // pred_fallthru
      _
    // Predicated region
    $region54: #{tpu_custom_call.1} parent=1 // pred_check
      _
    $region55: #{tpu_custom_call.1} parent=1 // pred_check_branch
      %434 = sbr.rel (0) target = $region57
    $region56: #{tpu_custom_call.1} parent=1 // pred_region
      %s436 = ssub.s32 128, 128
      %437 = vsyncadd [#allocation5], %s436
      %s439 = sshll.u32 [#allocation11], 4
      %s440 = int_to_ptr.vmem [resolvable:$true] %s439
      %442 = dma.vmem_to_hbm [thread:$0]  %s440, 128, %s7, [#allocation5]
    $region57: #{tpu_custom_call.1} parent=1 // pred_fallthru
      _
    // Predicated region
    $region58: #{tpu_custom_call.1} parent=1 // pred_check
      _
    $region59: #{tpu_custom_call.1} parent=1 // pred_check_branch
      %444 = sbr.rel (0) target = $region61
    $region60: #{tpu_custom_call.1} parent=1 // pred_region
      %445 = dma.done [#allocation5], 128
    $region61: #{tpu_custom_call.1} parent=1 // pred_fallthru
      _
    %446 = vsyncpa [#allocation4], 1
    %447 = vsyncpa [#allocation7], 1
    %448 = vsyncpa [#allocation10], 1
    %449 = vsyncpa [#allocation5], 1

// kernel: tpu_custom_call.1
$region0: #{tpu_custom_call.1}
  #allocation0 [shape = 'u32[]', space=smem, size = 0x4, offset = 0x4, fixed_abs, tag = 'smem constant byte address 0x4 - core index']
  #allocation1 [shape = 'u32[144,128]{1,0:T(1,128)}', space=vmem, size = 0x12000, scoped, tag = 'internal scratch']
  #allocation2 [shape = 'f32[8,128]{1,0:T(8,128)}', space=vmem, size = 0x1000, scoped, tag = 'scratch operand']
  %s0 = inlined_call_operand.hbm [shape: bf16[8,128], index: 0, kind: input, shape index: {}]
  %s1 = inlined_call_operand.hbm [shape: bf16[128,128], index: 1, kind: input, shape index: {}]
  %s2 = inlined_call_operand.vmem [shape: f32[1,128], index: 2, kind: input, shape index: {}]
  %s3 = inlined_call_operand.hbm [shape: bf16[128,128], index: 3, kind: input, shape index: {}]
  %s4 = inlined_call_operand.vmem [shape: f32[1,128], index: 4, kind: input, shape index: {}]
  %s5 = inlined_call_operand.hbm [shape: bf16[128,128], index: 5, kind: input, shape index: {}]
  %s6 = inlined_call_operand.vmem [shape: f32[1,128], index: 6, kind: input, shape index: {}]
  %s7 = inlined_call_operand.hbm [shape: f32[8,128], index: 7, kind: output, shape index: {}]
  %s8 = sld [smem:[#allocation0]]
  $region62: #{tpu_custom_call.1} parent=0
    _
  %s10 = ssub.s32 1, %s8
  %s11 = scalar_select 0, %s10, %s8
  $region1: #{tpu_custom_call.1} parent=0
    #allocation3 [shape = 'u8[2048]{0}', space=vmem, size = 0x800, scoped, tag = 'input window, operand 0, single buffered']
    #allocation4 [shape = 's32[1]{0}', space=sflag, size = 0x4, scoped, tag = 'scoped memory for tpu_custom_call.1']
    #allocation5 [shape = 's32[1]{0}', space=sflag, size = 0x4, scoped, tag = 'scoped memory for tpu_custom_call.1']
    #allocation6 [shape = 'u8[32768]{0}', space=vmem, size = 0x8000, scoped, tag = 'input window, operand 1, single buffered']
    #allocation7 [shape = 's32[1]{0}', space=sflag, size = 0x4, scoped, tag = 'scoped memory for tpu_custom_call.1']
    #allocation8 [shape = 'u8[32768]{0}', space=vmem, size = 0x8000, scoped, tag = 'input window, operand 3, single buffered']
    #allocation9 [shape = 'u8[32768]{0}', space=vmem, size = 0x8000, scoped, tag = 'input window, operand 5, single buffered']
    #allocation10 [shape = 's32[1]{0}', space=sflag, size = 0x4, scoped, tag = 'scoped memory for tpu_custom_call.1']
    #allocation11 [shape = 'u8[4096]{0}', space=vmem, size = 0x1000, scoped, tag = 'output window, operand 0, single buffered']
    %12 = vsyncpa [#allocation4], 0
    %13 = vsyncpa [#allocation7], 0
    %14 = vsyncpa [#allocation10], 0
    %15 = vsyncpa [#allocation5], 0
    // Predicated region
    $region2: #{tpu_custom_call.1} parent=1 // pred_check
      _
    $region3: #{tpu_custom_call.1} parent=1 // pred_check_branch
      %17 = sbr.rel (0) target = $region5
    $region4: #{tpu_custom_call.1} parent=1 // pred_region
      %s19 = ssub.s32 64, 64
      %20 = vsyncadd [#allocation4], %s19
      %s22 = sshll.u32 [#allocation3], 4
      %s23 = int_to_ptr.vmem [resolvable:$true] %s22
      %25 = dma.hbm_to_vmem [thread:$0]  %s0, 64, %s23, [#allocation4]
    $region5: #{tpu_custom_call.1} parent=1 // pred_fallthru
      _
    // Predicated region
    $region6: #{tpu_custom_call.1} parent=1 // pred_check
      _
    $region7: #{tpu_custom_call.1} parent=1 // pred_check_branch
      %27 = sbr.rel (0) target = $region9
    $region8: #{tpu_custom_call.1} parent=1 // pred_region
      %s29 = ssub.s32 1024, 1024
      %30 = vsyncadd [#allocation7], %s29
      %s31 = sshll.u32 [#allocation6], 4
      %s32 = int_to_ptr.vmem [resolvable:$true] %s31
      %37 = dma.hbm_to_vmem [thread:$0]  %s1, 1024, %s32, [#allocation7], 64, 64, 4
    $region9: #{tpu_custom_call.1} parent=1 // pred_fallthru
      _
    // Predicated region
    $region10: #{tpu_custom_call.1} parent=1 // pred_check
      _
    $region11: #{tpu_custom_call.1} parent=1 // pred_check_branch
      %39 = sbr.rel (0) target = $region13
    $region12: #{tpu_custom_call.1} parent=1 // pred_region
      _
    $region13: #{tpu_custom_call.1} parent=1 // pred_fallthru
      _
    // Predicated region
    $region14: #{tpu_custom_call.1} parent=1 // pred_check
      _
    $region15: #{tpu_custom_call.1} parent=1 // pred_check_branch
      %41 = sbr.rel (0) target = $region17
    $region16: #{tpu_custom_call.1} parent=1 // pred_region
      %s43 = ssub.s32 1024, 1024
      %44 = vsyncadd [#allocation7], %s43
      %s45 = sshll.u32 [#allocation8], 4
      %s46 = int_to_ptr.vmem [resolvable:$true] %s45
      %51 = dma.hbm_to_vmem [thread:$0]  %s3, 1024, %s46, [#allocation7], 64, 64, 4
    $region17: #{tpu_custom_call.1} parent=1 // pred_fallthru
      _
    // Predicated region
    $region18: #{tpu_custom_call.1} parent=1 // pred_check
      _
    $region19: #{tpu_custom_call.1} parent=1 // pred_check_branch
      %53 = sbr.rel (0) target = $region21
    $region20: #{tpu_custom_call.1} parent=1 // pred_region
      _
    $region21: #{tpu_custom_call.1} parent=1 // pred_fallthru
      _
    // Predicated region
    $region22: #{tpu_custom_call.1} parent=1 // pred_check
      _
    $region23: #{tpu_custom_call.1} parent=1 // pred_check_branch
      %55 = sbr.rel (0) target = $region25
    $region24: #{tpu_custom_call.1} parent=1 // pred_region
      %s57 = ssub.s32 1024, 1024
      %58 = vsyncadd [#allocation10], %s57
      %s59 = sshll.u32 [#allocation9], 4
      %s60 = int_to_ptr.vmem [resolvable:$true] %s59
      %65 = dma.hbm_to_vmem [thread:$0]  %s5, 1024, %s60, [#allocation10], 64, 64, 4
    $region25: #{tpu_custom_call.1} parent=1 // pred_fallthru
      _
    // Predicated region
    $region26: #{tpu_custom_call.1} parent=1 // pred_check
      _
    $region27: #{tpu_custom_call.1} parent=1 // pred_check_branch
      %67 = sbr.rel (0) target = $region29
    $region28: #{tpu_custom_call.1} parent=1 // pred_region
      _
    $region29: #{tpu_custom_call.1} parent=1 // pred_fallthru
      _
    // Predicated region
    $region30: #{tpu_custom_call.1} parent=1 // pred_check
      _
    $region31: #{tpu_custom_call.1} parent=1 // pred_check_branch
      %69 = sbr.rel (0) target = $region33
    $region32: #{tpu_custom_call.1} parent=1 // pred_region
      %70 = dma.done [#allocation4], 64
    $region33: #{tpu_custom_call.1} parent=1 // pred_fallthru
      _
    // Predicated region
    $region34: #{tpu_custom_call.1} parent=1 // pred_check
      _
    $region35: #{tpu_custom_call.1} parent=1 // pred_check_branch
      %72 = sbr.rel (0) target = $region37
    $region36: #{tpu_custom_call.1} parent=1 // pred_region
      %73 = dma.done [#allocation7], 1024
    $region37: #{tpu_custom_call.1} parent=1 // pred_fallthru
      _
    // Predicated region
    $region38: #{tpu_custom_call.1} parent=1 // pred_check
      _
    $region39: #{tpu_custom_call.1} parent=1 // pred_check_branch
      %75 = sbr.rel (0) target = $region41
    $region40: #{tpu_custom_call.1} parent=1 // pred_region
      %76 = dma.done [#allocation7], 1024
    $region41: #{tpu_custom_call.1} parent=1 // pred_fallthru
      _
    // Predicated region
    $region42: #{tpu_custom_call.1} parent=1 // pred_check
      _
    $region43: #{tpu_custom_call.1} parent=1 // pred_check_branch
      %78 = sbr.rel (0) target = $region45
    $region44: #{tpu_custom_call.1} parent=1 // pred_region
      %79 = dma.done [#allocation10], 1024
    $region45: #{tpu_custom_call.1} parent=1 // pred_fallthru
      _
    %p81 = scmp.eq.s32.totalorder 0, 0
    // Predicated region
    $region46: #{tpu_custom_call.1} parent=1 // pred_check
      %p82 = pneg %p81
    $region47: #{tpu_custom_call.1} parent=1 // pred_check_branch
      %84 = sbr.rel (%p82) target = $region49
    $region48: #{tpu_custom_call.1} parent=1 // pred_region
      %85 = vst [vmem:[#allocation2] sm:$0xff] 0.0
    $region49: #{tpu_custom_call.1} parent=1 // pred_fallthru
      _
    %v86 = vld [vmem:[#allocation3] sm:$0xf]
    %v87 = vld [vmem:[#allocation6] sm:$0xf]
    %v88 = vld [vmem:[#allocation6 + $0x4] sm:$0xf]
    %v89 = vld [vmem:[#allocation6 + $0x8] sm:$0xf]
    %v90 = vld [vmem:[#allocation6 + $0xc] sm:$0xf]
    %v91 = vld [vmem:[#allocation6 + $0x10] sm:$0xf]
    %v92 = vld [vmem:[#allocation6 + $0x14] sm:$0xf]
    %v93 = vld [vmem:[#allocation6 + $0x18] sm:$0xf]
    %v94 = vld [vmem:[#allocation6 + $0x1c] sm:$0xf]
    %v95 = vld [vmem:[#allocation6 + $0x20] sm:$0xf]
    %v96 = vld [vmem:[#allocation6 + $0x24] sm:$0xf]
    %v97 = vld [vmem:[#allocation6 + $0x28] sm:$0xf]
    %v98 = vld [vmem:[#allocation6 + $0x2c] sm:$0xf]
    %v99 = vld [vmem:[#allocation6 + $0x30] sm:$0xf]
    %v100 = vld [vmem:[#allocation6 + $0x34] sm:$0xf]
    %v101 = vld [vmem:[#allocation6 + $0x38] sm:$0xf]
    %v102 = vld [vmem:[#allocation6 + $0x3c] sm:$0xf]
    %v103 = vld [vmem:[%s2] sm:$0x1]
    %v105 = vlaneseq
    %v106 = vshrl.u32 %v105, 7
    %v107 = vsub.s32 0, %v106
    %v108 = vrot.slane %v103, %v107
    %v126 = vunpack.c.l.b16 %v87
    %v127 = vunpack.c.l.b16 %v88
    %v128 = vunpack.c.l.b16 %v89
    %v129 = vunpack.c.l.b16 %v90
    %v130 = vunpack.c.l.b16 %v91
    %v131 = vunpack.c.l.b16 %v92
    %v132 = vunpack.c.l.b16 %v93
    %v133 = vunpack.c.l.b16 %v94
    %v134 = vunpack.c.l.b16 %v95
    %v135 = vunpack.c.l.b16 %v96
    %v136 = vunpack.c.l.b16 %v97
    %v137 = vunpack.c.l.b16 %v98
    %v138 = vunpack.c.l.b16 %v99
    %v139 = vunpack.c.l.b16 %v100
    %v140 = vunpack.c.l.b16 %v101
    %v141 = vunpack.c.l.b16 %v102
    %v142 = vpack.c.b16 %v127, %v126
    %v143 = vpack.c.b16 %v129, %v128
    %v144 = vpack.c.b16 %v131, %v130
    %v145 = vpack.c.b16 %v133, %v132
    %v146 = vpack.c.b16 %v135, %v134
    %v147 = vpack.c.b16 %v137, %v136
    %v148 = vpack.c.b16 %v139, %v138
    %v149 = vpack.c.b16 %v141, %v140
    %158 = vmatprep.subr.bf16.mxu0 0
    %159 = vmatpush1.bf16.msra.mxu0 %v142
    %160 = vmatprep.subr.bf16.mxu0 0
    %161 = vmatpush1.bf16.msra.mxu0 %v143
    %162 = vmatprep.subr.bf16.mxu0 0
    %163 = vmatpush1.bf16.msra.mxu0 %v144
    %164 = vmatprep.subr.bf16.mxu0 0
    %165 = vmatpush1.bf16.msra.mxu0 %v145
    %166 = vmatprep.subr.bf16.mxu0 0
    %167 = vmatpush1.bf16.msra.mxu0 %v146
    %168 = vmatprep.subr.bf16.mxu0 0
    %169 = vmatpush1.bf16.msra.mxu0 %v147
    %170 = vmatprep.subr.bf16.mxu0 0
    %171 = vmatpush1.bf16.msra.mxu0 %v148
    %172 = vmatprep.subr.bf16.mxu0 0
    %173 = vmatpush1.bf16.msra.mxu0 %v149
    %174 = vmatprep.subr.bf16.mxu0 0
    %175 = vmatpush1.bf16.msra.mxu0 0
    %176 = vmatprep.subr.bf16.mxu0 0
    %177 = vmatpush1.bf16.msra.mxu0 0
    %178 = vmatprep.subr.bf16.mxu0 0
    %179 = vmatpush1.bf16.msra.mxu0 0
    %180 = vmatprep.subr.bf16.mxu0 0
    %181 = vmatpush1.bf16.msra.mxu0 0
    %182 = vmatprep.subr.bf16.mxu0 0
    %183 = vmatpush1.bf16.msra.mxu0 0
    %184 = vmatprep.subr.bf16.mxu0 0
    %185 = vmatpush1.bf16.msra.mxu0 0
    %186 = vmatprep.subr.bf16.mxu0 0
    %187 = vmatpush1.bf16.msra.mxu0 0
    %188 = vmatprep.subr.bf16.mxu0 0
    %189 = vmatpush1.bf16.msra.mxu0 0
    %190 = vmatprep.mubr.bf16.mxu0 0
    %191 = vmatmul.mubr.bf16.gmra.mrb[0].mxu0 %v86
    %v192 = vpop.f32.mrb[0].mxu0
    %v193 = vadd.f32 %v108, %v192
    %v194 = vpop.f32.mrb[0].mxu0
    %v195 = vpop.f32.mrb[0].mxu0
    %v196 = vpop.f32.mrb[0].mxu0
    %197 = vdwg.mxu0
    %v198 = vmax.f32 %v193, 0.0
    %v199 = vld [vmem:[#allocation2] sm:$0xff]
    %v200 = vpack.c.bf16 %v198, %v198
    %v201 = vld [vmem:[#allocation8] sm:$0xf]
    %v202 = vld [vmem:[#allocation8 + $0x4] sm:$0xf]
    %v203 = vld [vmem:[#allocation8 + $0x8] sm:$0xf]
    %v204 = vld [vmem:[#allocation8 + $0xc] sm:$0xf]
    %v205 = vld [vmem:[#allocation8 + $0x10] sm:$0xf]
    %v206 = vld [vmem:[#allocation8 + $0x14] sm:$0xf]
    %v207 = vld [vmem:[#allocation8 + $0x18] sm:$0xf]
    %v208 = vld [vmem:[#allocation8 + $0x1c] sm:$0xf]
    %v209 = vld [vmem:[#allocation8 + $0x20] sm:$0xf]
    %v210 = vld [vmem:[#allocation8 + $0x24] sm:$0xf]
    %v211 = vld [vmem:[#allocation8 + $0x28] sm:$0xf]
    %v212 = vld [vmem:[#allocation8 + $0x2c] sm:$0xf]
    %v213 = vld [vmem:[#allocation8 + $0x30] sm:$0xf]
    %v214 = vld [vmem:[#allocation8 + $0x34] sm:$0xf]
    %v215 = vld [vmem:[#allocation8 + $0x38] sm:$0xf]
    %v216 = vld [vmem:[#allocation8 + $0x3c] sm:$0xf]
    %v233 = vunpack.c.l.b16 %v201
    %v234 = vunpack.c.l.b16 %v202
    %v235 = vunpack.c.l.b16 %v203
    %v236 = vunpack.c.l.b16 %v204
    %v237 = vunpack.c.l.b16 %v205
    %v238 = vunpack.c.l.b16 %v206
    %v239 = vunpack.c.l.b16 %v207
    %v240 = vunpack.c.l.b16 %v208
    %v241 = vunpack.c.l.b16 %v209
    %v242 = vunpack.c.l.b16 %v210
    %v243 = vunpack.c.l.b16 %v211
    %v244 = vunpack.c.l.b16 %v212
    %v245 = vunpack.c.l.b16 %v213
    %v246 = vunpack.c.l.b16 %v214
    %v247 = vunpack.c.l.b16 %v215
    %v248 = vunpack.c.l.b16 %v216
    %v249 = vpack.c.b16 %v234, %v233
    %v250 = vpack.c.b16 %v236, %v235
    %v251 = vpack.c.b16 %v238, %v237
    %v252 = vpack.c.b16 %v240, %v239
    %v253 = vpack.c.b16 %v242, %v241
    %v254 = vpack.c.b16 %v244, %v243
    %v255 = vpack.c.b16 %v246, %v245
    %v256 = vpack.c.b16 %v248, %v247
    %265 = vmatprep.subr.bf16.mxu0 0
    %266 = vmatpush1.bf16.msra.mxu0 %v249
    %267 = vmatprep.subr.bf16.mxu0 0
    %268 = vmatpush1.bf16.msra.mxu0 %v250
    %269 = vmatprep.subr.bf16.mxu0 0
    %270 = vmatpush1.bf16.msra.mxu0 %v251
    %271 = vmatprep.subr.bf16.mxu0 0
    %272 = vmatpush1.bf16.msra.mxu0 %v252
    %273 = vmatprep.subr.bf16.mxu0 0
    %274 = vmatpush1.bf16.msra.mxu0 %v253
    %275 = vmatprep.subr.bf16.mxu0 0
    %276 = vmatpush1.bf16.msra.mxu0 %v254
    %277 = vmatprep.subr.bf16.mxu0 0
    %278 = vmatpush1.bf16.msra.mxu0 %v255
    %279 = vmatprep.subr.bf16.mxu0 0
    %280 = vmatpush1.bf16.msra.mxu0 %v256
    %281 = vmatprep.subr.bf16.mxu0 0
    %282 = vmatpush1.bf16.msra.mxu0 0
    %283 = vmatprep.subr.bf16.mxu0 0
    %284 = vmatpush1.bf16.msra.mxu0 0
    %285 = vmatprep.subr.bf16.mxu0 0
    %286 = vmatpush1.bf16.msra.mxu0 0
    %287 = vmatprep.subr.bf16.mxu0 0
    %288 = vmatpush1.bf16.msra.mxu0 0
    %289 = vmatprep.subr.bf16.mxu0 0
    %290 = vmatpush1.bf16.msra.mxu0 0
    %291 = vmatprep.subr.bf16.mxu0 0
    %292 = vmatpush1.bf16.msra.mxu0 0
    %293 = vmatprep.subr.bf16.mxu0 0
    %294 = vmatpush1.bf16.msra.mxu0 0
    %295 = vmatprep.subr.bf16.mxu0 0
    %296 = vmatpush1.bf16.msra.mxu0 0
    %297 = vmatprep.mubr.bf16.mxu0 0
    %298 = vmatmul.mubr.bf16.gmra.mrb[0].mxu0 %v200
    %v299 = vpop.f32.mrb[0].mxu0
    %v300 = vadd.f32 0.0, %v299
    %v301 = vpop.f32.mrb[0].mxu0
    %v302 = vpop.f32.mrb[0].mxu0
    %v303 = vpop.f32.mrb[0].mxu0
    %304 = vdwg.mxu0
    %v305 = vadd.f32 %v199, %v300
    %306 = vst [vmem:[#allocation2] sm:$0xff] %v305
    // Predicated region
    $region50: #{tpu_custom_call.1} parent=1 // pred_check
      %p307 = pneg %p81
    $region51: #{tpu_custom_call.1} parent=1 // pred_check_branch
      %309 = sbr.rel (%p307) target = $region53
    $region52: #{tpu_custom_call.1} parent=1 // pred_region
      %v310 = vld [vmem:[#allocation2] sm:$0xff]
      %v311 = vld [vmem:[%s4] sm:$0x1]
      %v313 = vlaneseq
      %v314 = vshrl.u32 %v313, 7
      %v315 = vsub.s32 0, %v314
      %v316 = vrot.slane %v311, %v315
      %v318 = vadd.f32 %v310, %v316
      %v319 = vmax.f32 %v318, 0.0
      %v320 = vpack.c.bf16 %v319, %v319
      %v321 = vld [vmem:[#allocation9] sm:$0xf]
      %v322 = vld [vmem:[#allocation9 + $0x4] sm:$0xf]
      %v323 = vld [vmem:[#allocation9 + $0x8] sm:$0xf]
      %v324 = vld [vmem:[#allocation9 + $0xc] sm:$0xf]
      %v325 = vld [vmem:[#allocation9 + $0x10] sm:$0xf]
      %v326 = vld [vmem:[#allocation9 + $0x14] sm:$0xf]
      %v327 = vld [vmem:[#allocation9 + $0x18] sm:$0xf]
      %v328 = vld [vmem:[#allocation9 + $0x1c] sm:$0xf]
      %v329 = vld [vmem:[#allocation9 + $0x20] sm:$0xf]
      %v330 = vld [vmem:[#allocation9 + $0x24] sm:$0xf]
      %v331 = vld [vmem:[#allocation9 + $0x28] sm:$0xf]
      %v332 = vld [vmem:[#allocation9 + $0x2c] sm:$0xf]
      %v333 = vld [vmem:[#allocation9 + $0x30] sm:$0xf]
      %v334 = vld [vmem:[#allocation9 + $0x34] sm:$0xf]
      %v335 = vld [vmem:[#allocation9 + $0x38] sm:$0xf]
      %v336 = vld [vmem:[#allocation9 + $0x3c] sm:$0xf]
      %v337 = vld [vmem:[%s6] sm:$0x1]
      %v339 = vlaneseq
      %v340 = vshrl.u32 %v339, 7
      %v341 = vsub.s32 0, %v340
      %v342 = vrot.slane %v337, %v341
      %v360 = vunpack.c.l.b16 %v321
      %v361 = vunpack.c.l.b16 %v322
      %v362 = vunpack.c.l.b16 %v323
      %v363 = vunpack.c.l.b16 %v324
      %v364 = vunpack.c.l.b16 %v325
      %v365 = vunpack.c.l.b16 %v326
      %v366 = vunpack.c.l.b16 %v327
      %v367 = vunpack.c.l.b16 %v328
      %v368 = vunpack.c.l.b16 %v329
      %v369 = vunpack.c.l.b16 %v330
      %v370 = vunpack.c.l.b16 %v331
      %v371 = vunpack.c.l.b16 %v332
      %v372 = vunpack.c.l.b16 %v333
      %v373 = vunpack.c.l.b16 %v334
      %v374 = vunpack.c.l.b16 %v335
      %v375 = vunpack.c.l.b16 %v336
      %v376 = vpack.c.b16 %v361, %v360
      %v377 = vpack.c.b16 %v363, %v362
      %v378 = vpack.c.b16 %v365, %v364
      %v379 = vpack.c.b16 %v367, %v366
      %v380 = vpack.c.b16 %v369, %v368
      %v381 = vpack.c.b16 %v371, %v370
      %v382 = vpack.c.b16 %v373, %v372
      %v383 = vpack.c.b16 %v375, %v374
      %392 = vmatprep.subr.bf16.mxu0 0
      %393 = vmatpush1.bf16.msra.mxu0 %v376
      %394 = vmatprep.subr.bf16.mxu0 0
      %395 = vmatpush1.bf16.msra.mxu0 %v377
      %396 = vmatprep.subr.bf16.mxu0 0
      %397 = vmatpush1.bf16.msra.mxu0 %v378
      %398 = vmatprep.subr.bf16.mxu0 0
      %399 = vmatpush1.bf16.msra.mxu0 %v379
      %400 = vmatprep.subr.bf16.mxu0 0
      %401 = vmatpush1.bf16.msra.mxu0 %v380
      %402 = vmatprep.subr.bf16.mxu0 0
      %403 = vmatpush1.bf16.msra.mxu0 %v381
      %404 = vmatprep.subr.bf16.mxu0 0
      %405 = vmatpush1.bf16.msra.mxu0 %v382
      %406 = vmatprep.subr.bf16.mxu0 0
      %407 = vmatpush1.bf16.msra.mxu0 %v383
      %408 = vmatprep.subr.bf16.mxu0 0
      %409 = vmatpush1.bf16.msra.mxu0 0
      %410 = vmatprep.subr.bf16.mxu0 0
      %411 = vmatpush1.bf16.msra.mxu0 0
      %412 = vmatprep.subr.bf16.mxu0 0
      %413 = vmatpush1.bf16.msra.mxu0 0
      %414 = vmatprep.subr.bf16.mxu0 0
      %415 = vmatpush1.bf16.msra.mxu0 0
      %416 = vmatprep.subr.bf16.mxu0 0
      %417 = vmatpush1.bf16.msra.mxu0 0
      %418 = vmatprep.subr.bf16.mxu0 0
      %419 = vmatpush1.bf16.msra.mxu0 0
      %420 = vmatprep.subr.bf16.mxu0 0
      %421 = vmatpush1.bf16.msra.mxu0 0
      %422 = vmatprep.subr.bf16.mxu0 0
      %423 = vmatpush1.bf16.msra.mxu0 0
      %424 = vmatprep.mubr.bf16.mxu0 0
      %425 = vmatmul.mubr.bf16.gmra.mrb[0].mxu0 %v320
      %v426 = vpop.f32.mrb[0].mxu0
      %v427 = vadd.f32 %v342, %v426
      %v428 = vpop.f32.mrb[0].mxu0
      %v429 = vpop.f32.mrb[0].mxu0
      %v430 = vpop.f32.mrb[0].mxu0
      %431 = vdwg.mxu0
      %432 = vst [vmem:[#allocation11] sm:$0xff] %v427
    $region53: #{tpu_custom_call.1} parent=1 // pred_fallthru
      _
    // Predicated region
    $region54: #{tpu_custom_call.1} parent=1 // pred_check
      _
    $region55: #{tpu_custom_call.1} parent=1 // pred_check_branch
      %434 = sbr.rel (0) target = $region57
    $region56: #{tpu_custom_call.1} parent=1 // pred_region
      %s436 = ssub.s32 128, 128
      %437 = vsyncadd [#allocation5], %s436
      %s439 = sshll.u32 [#allocation11], 4
      %s440 = int_to_ptr.vmem [resolvable:$true] %s439
      %442 = dma.vmem_to_hbm [thread:$0]  %s440, 128, %s7, [#allocation5]
    $region57: #{tpu_custom_call.1} parent=1 // pred_fallthru
      _
    // Predicated region
    $region58: #{tpu_custom_call.1} parent=1 // pred_check
      _
    $region59: #{tpu_custom_call.1} parent=1 // pred_check_branch
      %444 = sbr.rel (0) target = $region61
    $region60: #{tpu_custom_call.1} parent=1 // pred_region
      %445 = dma.done [#allocation5], 128
    $region61: #{tpu_custom_call.1} parent=1 // pred_fallthru
      _
    %446 = vsyncpa [#allocation4], 1
    %447 = vsyncpa [#allocation7], 1
    %448 = vsyncpa [#allocation10], 1
    %449 = vsyncpa [#allocation5], 1

</llo_original>
